<compile_context>
chip_gen: v5e
topology: v5e:2x2
jax: 0.10.0
libtpu: 0.0.40
codegen_flags: <defaults>
</compile_context>

<pallas_src>
import jax
import jax.numpy as jnp
from jax.experimental import pallas as pl
from jax.experimental.pallas import tpu as pltpu


def basic_block_kernel(x_ref, w1_ref, b1_ref, w2_ref, b2_ref, nf_ref, nl_ref, out_ref):
    """One grid step: nb whole sequences, M = nb*L rows, channels lane-dense (padded).

    x_ref  : (M, Cp)     activations, compute dtype (bf16 or f32)
    w1_ref : (3*Cp, Cp)  conv1 taps K-packed (BN1 scale folded), compute dtype
    b1_ref : (1, Cp)     folded BN1 bias, f32
    w2_ref : (3*Cp, Cp)  conv2 taps K-packed (BN2 scale folded), compute dtype
    b2_ref : (1, Cp)     folded BN2 bias, f32
    nf_ref : (M, Cp)     f32 mask, 0 on rows with l == 0      (left zero-pad of the conv)
    nl_ref : (M, Cp)     f32 mask, 0 on rows with l == L-1    (right zero-pad of the conv)
    out_ref: (M, Cp)     f32
    """
    m = x_ref.shape[0]
    mxu_dtype = w1_ref.dtype

    def packed_taps(v):
        # v: (M, Cp) f32 -> (M, 3*Cp) MXU operand [v_prev || v || v_next].
        # Shifts are +-1 sublane rolls (XLU slot); per-sequence boundary rows (and the roll
        # wrap-around rows) are zeroed with the precomputed resident masks (one vmul each).
        prev = pltpu.roll(v, 1, axis=0) * nf_ref[...]        # row r sees v[r-1]
        nxt = pltpu.roll(v, m - 1, axis=0) * nl_ref[...]     # row r sees v[r+1]
        return jnp.concatenate([prev, v, nxt], axis=-1).astype(mxu_dtype)

    # conv1 (fused 3-tap matmul, f32 accumulation) + folded-BN1 bias + ReLU.
    h = jnp.dot(packed_taps(x_ref[...].astype(jnp.float32)), w1_ref[...],
                preferred_element_type=jnp.float32)
    h = jnp.maximum(h + b1_ref[...], 0.0)

    # conv2 (fused 3-tap matmul) + folded-BN2 bias.
    o = jnp.dot(packed_taps(h), w2_ref[...], preferred_element_type=jnp.float32)
    o = o + b2_ref[...]

    # Residual add (identity re-read from the resident input block) + ReLU.
    out_ref[...] = jnp.maximum(o + x_ref[...].astype(jnp.float32), 0.0).astype(out_ref.dtype)


def _round_up(x, m):
    return (x + m - 1) // m * m


def _fold_bn(gamma, beta, mean, var, eps=1e-5):
    scale = gamma / jnp.sqrt(var + eps)
    bias = beta - mean * scale
    return scale.astype(jnp.float32), bias.astype(jnp.float32)


def _pack_conv_weight(w, scale, c_pad, dtype):
    """(Cout, Cin, 3) PyTorch Conv1d weight -> (3*Cp, Cp) K-packed matmul weight.

    Rows [0:Cp) act on the 'prev' columns of the packed operand (tap k=0), [Cp:2Cp) on the
    center (k=1), [2Cp:3Cp) on 'next' (k=2).  The BN scale is folded into output channels.
    """
    c_out, c_in, _ = w.shape
    w_t = jnp.transpose(w, (2, 1, 0)).astype(jnp.float32) * scale[None, None, :]  # (3,Cin,Cout)
    w_pad = jnp.zeros((3, c_pad, c_pad), jnp.float32).at[:, :c_in, :c_out].set(w_t)
    return w_pad.reshape(3 * c_pad, c_pad).astype(dtype)


def _tpu_info():
    try:
        return pltpu.get_tpu_info()
    except Exception:
        return None


def _vmem_limit_bytes(default=64 * 1024 * 1024):
    """Scoped-VMEM limit derived from the chip (v5e/v6e: 128 MiB phys, v7x: 64 MiB)."""
    info = _tpu_info()
    cap = getattr(info, "vmem_capacity_bytes", None) if info is not None else None
    if cap:
        return min(int(cap) * 3 // 4, 128 * 1024 * 1024)
    return default


def _num_tensorcores(default=1):
    info = _tpu_info()
    if info is not None:
        for attr in ("num_cores", "core_count", "num_tensorcores", "tensorcore_count"):
            v = getattr(info, attr, None)
            if isinstance(v, int) and v > 0:
                return v
    return default


def _pick_batch_tile(n, l, max_rows, num_cores=1):
    """Largest batch divisor whose row block fits `max_rows` and is sublane aligned.

    Single-TC chips (v5e/v6e): the grid is a serial loop, so take the biggest block (a
    single-step grid is fine).  Multi-TC chips (v7x): prefer a tile whose step count is a
    multiple of the core count so both TensorCores finish together.
    """
    cands = [d for d in range(1, n + 1)
             if n % d == 0 and d * l <= max_rows and (d * l) % 8 == 0]
    if not cands:
        return n          # single full-array block (exempt from the (8,128) constraint)
    if num_cores > 1:
        balanced = [d for d in cands if (n // d) % num_cores == 0]
        if balanced:
            return balanced[-1]
    return cands[-1]


def basic_block(x, w1, bn1, w2, bn2, eps=1e-5, compute_dtype=jnp.bfloat16,
                max_block_rows=1024):
    """BasicBlock forward (stride=1, downsample=None), eval-mode BN.

    x: (N, C, L) float32 NCL (like nn.Conv1d); w1/w2: (Cout, Cin, 3);
    bn1/bn2: (gamma, beta, running_mean, running_var).  Returns (N, C, L) float32.
    """
    n, c_in, l = x.shape
    c_out = w1.shape[0]
    assert c_in == c_out, "stride=1, downsample=None requires in_planes == planes"
    c_pad = _round_up(c_in, 128)                  # lane-dense channel axis

    # Fold eval-mode BN into the conv weights/biases; pack the 3 taps along K.
    s1, b1 = _fold_bn(*bn1, eps=eps)
    s2, b2 = _fold_bn(*bn2, eps=eps)
    w1_k = _pack_conv_weight(w1, s1, c_pad, compute_dtype)
    w2_k = _pack_conv_weight(w2, s2, c_pad, compute_dtype)
    b1_k = jnp.zeros((1, c_pad), jnp.float32).at[0, :c_out].set(b1)
    b2_k = jnp.zeros((1, c_pad), jnp.float32).at[0, :c_out].set(b2)

    # NCL -> (N*L, Cp) rows: channels lane-dense (zero padded), batch*length on matmul M.
    x_rows = jnp.transpose(x, (0, 2, 1)).astype(compute_dtype)          # (N, L, C)
    x_rows = jnp.pad(x_rows, ((0, 0), (0, 0), (0, c_pad - c_in)))
    x_rows = x_rows.reshape(n * l, c_pad)

    # Tiling: VMEM-derived row budget; biggest block on 1-TC chips, balanced steps on v7x.
    vmem_limit = _vmem_limit_bytes()
    row_budget = max(8, vmem_limit // (64 * c_pad))     # ~64 B of live state per row*lane
    row_budget -= row_budget % 8
    nb = _pick_batch_tile(n, l, min(max_block_rows, row_budget), _num_tensorcores())
    block_rows = nb * l
    grid = (n // nb,)

    # Precomputed per-sequence boundary masks (constant index_map -> resident after step 0).
    pos = jnp.arange(block_rows, dtype=jnp.int32) % l
    nf_mask = jnp.broadcast_to((pos != 0)[:, None], (block_rows, c_pad)).astype(jnp.float32)
    nl_mask = jnp.broadcast_to((pos != l - 1)[:, None], (block_rows, c_pad)).astype(jnp.float32)

    out_rows = pl.pallas_call(
        basic_block_kernel,
        out_shape=jax.ShapeDtypeStruct((n * l, c_pad), jnp.float32),
        grid_spec=pltpu.PrefetchScalarGridSpec(
            num_scalar_prefetch=0,
            grid=grid,
            in_specs=[
                pl.BlockSpec((block_rows, c_pad), lambda i: (i, 0)),     # x rows
                pl.BlockSpec((3 * c_pad, c_pad), lambda i: (0, 0)),      # w1 (K-packed)
                pl.BlockSpec((1, c_pad), lambda i: (0, 0)),              # b1
                pl.BlockSpec((3 * c_pad, c_pad), lambda i: (0, 0)),      # w2 (K-packed)
                pl.BlockSpec((1, c_pad), lambda i: (0, 0)),              # b2
                pl.BlockSpec((block_rows, c_pad), lambda i: (0, 0)),     # not-first mask
                pl.BlockSpec((block_rows, c_pad), lambda i: (0, 0)),     # not-last mask
            ],
            out_specs=pl.BlockSpec((block_rows, c_pad), lambda i: (i, 0)),
        ),
        compiler_params=pltpu.CompilerParams(
            dimension_semantics=("parallel",),
            vmem_limit_bytes=vmem_limit,
        ),
    )(x_rows, w1_k, b1_k, w2_k, b2_k, nf_mask, nl_mask)

    out = out_rows[:, :c_out].reshape(n, l, c_out)
    return jnp.transpose(out, (0, 2, 1))


def _reference(x, w1, bn1, w2, bn2, eps=1e-5):
    """Plain-JAX reference (eval-mode BN), full-f32 precision."""
    def conv(x, w):
        return jax.lax.conv_general_dilated(
            x, w, window_strides=(1,), padding=((1, 1),),
            dimension_numbers=("NCH", "OIH", "NCH"),
            precision=jax.lax.Precision.HIGHEST)

    def bn(x, p):
        g, b, m, v = p
        return ((x - m[None, :, None]) / jnp.sqrt(v[None, :, None] + eps)
                * g[None, :, None] + b[None, :, None])

    h = jax.nn.relu(bn(conv(x, w1), bn1))
    o = bn(conv(h, w2), bn2)
    return jax.nn.relu(o + x)


if __name__ == "__main__":
    # Small shapes consistent with the module: batch=2, in_planes=planes=8, length=16
    # (stride=1, downsample=None).
    N, C, L = 2, 8, 16
    key = jax.random.PRNGKey(0)
    kx, kw1, kw2, kg1, kb1, kg2, kb2, km1, kv1, km2, kv2 = jax.random.split(key, 11)

    x = jax.random.normal(kx, (N, C, L), jnp.float32)
    w1 = jax.random.normal(kw1, (C, C, 3), jnp.float32) * 0.2   # Conv1d weight (Cout, Cin, 3)
    w2 = jax.random.normal(kw2, (C, C, 3), jnp.float32) * 0.2

    bn1 = (jax.random.uniform(kg1, (C,), jnp.float32, 0.5, 1.5),   # gamma
           jax.random.normal(kb1, (C,), jnp.float32) * 0.1,        # beta
           jax.random.normal(km1, (C,), jnp.float32) * 0.1,        # running_mean
           jax.random.uniform(kv1, (C,), jnp.float32, 0.5, 1.5))   # running_var
    bn2 = (jax.random.uniform(kg2, (C,), jnp.float32, 0.5, 1.5),
           jax.random.normal(kb2, (C,), jnp.float32) * 0.1,
           jax.random.normal(km2, (C,), jnp.float32) * 0.1,
           jax.random.uniform(kv2, (C,), jnp.float32, 0.5, 1.5))

    ref = _reference(x, w1, bn1, w2, bn2)

    # f32 MXU operands: tight check against the f32 reference.
    out_f32 = jax.block_until_ready(
        basic_block(x, w1, bn1, w2, bn2, compute_dtype=jnp.float32))
    assert out_f32.shape == (N, C, L)
    assert jnp.allclose(out_f32, ref, rtol=1e-3, atol=1e-3), "f32 kernel mismatch vs reference"

    # bf16 MXU operands + f32 accumulation (default perf path): looser bf16 tolerance.
    out_bf16 = jax.block_until_ready(basic_block(x, w1, bn1, w2, bn2))
    assert out_bf16.shape == (N, C, L)
    assert jnp.allclose(out_bf16, ref, rtol=5e-2, atol=5e-2), "bf16 kernel mismatch vs reference"

    print("KERNEL_OK")
</pallas_src>

<mosaic_0001>
module attributes {stable_mosaic.version = 11 : i64} {
  func.func @basic_block_kernel(%arg0: i32, %arg1: memref<32x128xf32, #tpu.memory_space<vmem>>, %arg2: memref<384x128xf32, #tpu.memory_space<vmem>>, %arg3: memref<1x128xf32, #tpu.memory_space<vmem>>, %arg4: memref<384x128xf32, #tpu.memory_space<vmem>>, %arg5: memref<1x128xf32, #tpu.memory_space<vmem>>, %arg6: memref<32x128xf32, #tpu.memory_space<vmem>>, %arg7: memref<32x128xf32, #tpu.memory_space<vmem>>, %arg8: memref<32x128xf32, #tpu.memory_space<vmem>>) attributes {dimension_semantics = [#tpu.dimension_semantics<parallel>], iteration_bounds = array<i64: 1>, scalar_prefetch = 0 : i64, scratch_operands = 0 : i64, tpu.core_type = #tpu.core_type<tc>, window_params = [{transform_indices = @transform_0, window_bounds = array<i64: 32, 128>}, {pipeline_mode = #tpu.pipeline_mode<synchronous>, transform_indices = @transform_1, window_bounds = array<i64: 384, 128>}, {pipeline_mode = #tpu.pipeline_mode<synchronous>, transform_indices = @transform_2, window_bounds = array<i64: 1, 128>}, {pipeline_mode = #tpu.pipeline_mode<synchronous>, transform_indices = @transform_3, window_bounds = array<i64: 384, 128>}, {pipeline_mode = #tpu.pipeline_mode<synchronous>, transform_indices = @transform_4, window_bounds = array<i64: 1, 128>}, {pipeline_mode = #tpu.pipeline_mode<synchronous>, transform_indices = @transform_5, window_bounds = array<i64: 32, 128>}, {pipeline_mode = #tpu.pipeline_mode<synchronous>, transform_indices = @transform_6, window_bounds = array<i64: 32, 128>}, {transform_indices = @transform_7, window_bounds = array<i64: 32, 128>}]} {
    %c0 = arith.constant 0 : index
    %c0_0 = arith.constant 0 : index
    %0 = vector.load %arg1[%c0, %c0_0] : memref<32x128xf32, #tpu.memory_space<vmem>>, vector<32x128xf32>
    %c1_i32 = arith.constant 1 : i32
    %1 = tpu.dynamic_rotate %0 by %c1_i32 dim 0 : vector<32x128xf32>, i32 -> vector<32x128xf32>
    %c0_1 = arith.constant 0 : index
    %c0_2 = arith.constant 0 : index
    %2 = vector.load %arg6[%c0_1, %c0_2] : memref<32x128xf32, #tpu.memory_space<vmem>>, vector<32x128xf32>
    %3 = arith.mulf %1, %2 : vector<32x128xf32>
    %c31_i32 = arith.constant 31 : i32
    %4 = tpu.dynamic_rotate %0 by %c31_i32 dim 0 : vector<32x128xf32>, i32 -> vector<32x128xf32>
    %c0_3 = arith.constant 0 : index
    %c0_4 = arith.constant 0 : index
    %5 = vector.load %arg7[%c0_3, %c0_4] : memref<32x128xf32, #tpu.memory_space<vmem>>, vector<32x128xf32>
    %6 = arith.mulf %4, %5 : vector<32x128xf32>
    %7 = tpu.concatenate %3, %0, %6 in 1 : vector<32x128xf32>, vector<32x128xf32>, vector<32x128xf32> -> vector<32x384xf32>
    %c0_5 = arith.constant 0 : index
    %c0_6 = arith.constant 0 : index
    %8 = vector.load %arg2[%c0_5, %c0_6] : memref<384x128xf32, #tpu.memory_space<vmem>>, vector<384x128xf32>
    %cst = arith.constant dense<0.000000e+00> : vector<32x128xf32>
    %9 = tpu.matmul %7, %8, %cst {dimension_numbers = #tpu.dot_dimension_numbers<[1], [0], [0], [1], [0, 0, 1, 1], [], []>} : vector<32x384xf32>, vector<384x128xf32>, vector<32x128xf32> -> vector<32x128xf32>
    %c0_7 = arith.constant 0 : index
    %c0_8 = arith.constant 0 : index
    %10 = vector.load %arg3[%c0_7, %c0_8] : memref<1x128xf32, #tpu.memory_space<vmem>>, vector<1x128xf32>
    %11 = vector.broadcast %10 : vector<1x128xf32> to vector<32x128xf32>
    %12 = arith.addf %9, %11 : vector<32x128xf32>
    %cst_9 = arith.constant 0.000000e+00 : f32
    %13 = vector.broadcast %cst_9 : f32 to vector<32x128xf32>
    %14 = arith.maximumf %12, %13 : vector<32x128xf32>
    %c1_i32_10 = arith.constant 1 : i32
    %15 = tpu.dynamic_rotate %14 by %c1_i32_10 dim 0 : vector<32x128xf32>, i32 -> vector<32x128xf32>
    %c0_11 = arith.constant 0 : index
    %c0_12 = arith.constant 0 : index
    %16 = vector.load %arg6[%c0_11, %c0_12] : memref<32x128xf32, #tpu.memory_space<vmem>>, vector<32x128xf32>
    %17 = arith.mulf %15, %16 : vector<32x128xf32>
    %c31_i32_13 = arith.constant 31 : i32
    %18 = tpu.dynamic_rotate %14 by %c31_i32_13 dim 0 : vector<32x128xf32>, i32 -> vector<32x128xf32>
    %c0_14 = arith.constant 0 : index
    %c0_15 = arith.constant 0 : index
    %19 = vector.load %arg7[%c0_14, %c0_15] : memref<32x128xf32, #tpu.memory_space<vmem>>, vector<32x128xf32>
    %20 = arith.mulf %18, %19 : vector<32x128xf32>
    %21 = tpu.concatenate %17, %14, %20 in 1 : vector<32x128xf32>, vector<32x128xf32>, vector<32x128xf32> -> vector<32x384xf32>
    %c0_16 = arith.constant 0 : index
    %c0_17 = arith.constant 0 : index
    %22 = vector.load %arg4[%c0_16, %c0_17] : memref<384x128xf32, #tpu.memory_space<vmem>>, vector<384x128xf32>
    %cst_18 = arith.constant dense<0.000000e+00> : vector<32x128xf32>
    %23 = tpu.matmul %21, %22, %cst_18 {dimension_numbers = #tpu.dot_dimension_numbers<[1], [0], [0], [1], [0, 0, 1, 1], [], []>} : vector<32x384xf32>, vector<384x128xf32>, vector<32x128xf32> -> vector<32x128xf32>
    %c0_19 = arith.constant 0 : index
    %c0_20 = arith.constant 0 : index
    %24 = vector.load %arg5[%c0_19, %c0_20] : memref<1x128xf32, #tpu.memory_space<vmem>>, vector<1x128xf32>
    %25 = vector.broadcast %24 : vector<1x128xf32> to vector<32x128xf32>
    %26 = arith.addf %23, %25 : vector<32x128xf32>
    %c0_21 = arith.constant 0 : index
    %c0_22 = arith.constant 0 : index
    %27 = vector.load %arg1[%c0_21, %c0_22] : memref<32x128xf32, #tpu.memory_space<vmem>>, vector<32x128xf32>
    %28 = arith.addf %26, %27 : vector<32x128xf32>
    %cst_23 = arith.constant 0.000000e+00 : f32
    %29 = vector.broadcast %cst_23 : f32 to vector<32x128xf32>
    %30 = arith.maximumf %28, %29 : vector<32x128xf32>
    %c0_24 = arith.constant 0 : index
    %c0_25 = arith.constant 0 : index
    %31 = vector.load %arg8[%c0_24, %c0_25] : memref<32x128xf32, #tpu.memory_space<vmem>>, vector<32x128xf32>
    tpu.vector_store %arg8[%c0_24, %c0_25], %30 {strides = array<i32>} : memref<32x128xf32, #tpu.memory_space<vmem>>, vector<32x128xf32>,
    return
  }
  func.func @transform_0(%arg0: i32) -> (i32, i32) {
    %c0_i32 = arith.constant 0 : i32
    %c0_i32_0 = arith.constant 0 : i32
    return %arg0, %c0_i32 : i32, i32
  }
  func.func @transform_1(%arg0: i32) -> (i32, i32) {
    %c0_i32 = arith.constant 0 : i32
    %c0_i32_0 = arith.constant 0 : i32
    %c0_i32_1 = arith.constant 0 : i32
    return %c0_i32, %c0_i32_0 : i32, i32
  }
  func.func @transform_2(%arg0: i32) -> (i32, i32) {
    %c0_i32 = arith.constant 0 : i32
    %c0_i32_0 = arith.constant 0 : i32
    %c0_i32_1 = arith.constant 0 : i32
    return %c0_i32, %c0_i32_0 : i32, i32
  }
  func.func @transform_3(%arg0: i32) -> (i32, i32) {
    %c0_i32 = arith.constant 0 : i32
    %c0_i32_0 = arith.constant 0 : i32
    %c0_i32_1 = arith.constant 0 : i32
    return %c0_i32, %c0_i32_0 : i32, i32
  }
  func.func @transform_4(%arg0: i32) -> (i32, i32) {
    %c0_i32 = arith.constant 0 : i32
    %c0_i32_0 = arith.constant 0 : i32
    %c0_i32_1 = arith.constant 0 : i32
    return %c0_i32, %c0_i32_0 : i32, i32
  }
  func.func @transform_5(%arg0: i32) -> (i32, i32) {
    %c0_i32 = arith.constant 0 : i32
    %c0_i32_0 = arith.constant 0 : i32
    %c0_i32_1 = arith.constant 0 : i32
    return %c0_i32, %c0_i32_0 : i32, i32
  }
  func.func @transform_6(%arg0: i32) -> (i32, i32) {
    %c0_i32 = arith.constant 0 : i32
    %c0_i32_0 = arith.constant 0 : i32
    %c0_i32_1 = arith.constant 0 : i32
    return %c0_i32, %c0_i32_0 : i32, i32
  }
  func.func @transform_7(%arg0: i32) -> (i32, i32) {
    %c0_i32 = arith.constant 0 : i32
    %c0_i32_0 = arith.constant 0 : i32
    return %arg0, %c0_i32 : i32, i32
  }
}

</mosaic_0001>

<llo_original>
// kernel: tpu_custom_call.1
$region0: #{tpu_custom_call.1}
  #allocation0 [shape = 'u32[]', space=smem, size = 0x4, offset = 0x4, fixed_abs, tag = 'smem constant byte address 0x4 - core index']
  #allocation1 [shape = 'u32[72,128]{1,0:T(1,128)}', space=vmem, size = 0x9000, scoped, tag = 'internal scratch']
  %s0 = inlined_call_operand.hbm [shape: f32[32,128], index: 0, kind: input, shape index: {}]
  %s1 = inlined_call_operand.hbm [shape: f32[384,128], index: 1, kind: input, shape index: {}]
  %s2 = inlined_call_operand.vmem [shape: f32[1,128], index: 2, kind: input, shape index: {}]
  %s3 = inlined_call_operand.hbm [shape: f32[384,128], index: 3, kind: input, shape index: {}]
  %s4 = inlined_call_operand.vmem [shape: f32[1,128], index: 4, kind: input, shape index: {}]
  %s5 = inlined_call_operand.hbm [shape: f32[32,128], index: 5, kind: input, shape index: {}]
  %s6 = inlined_call_operand.hbm [shape: f32[32,128], index: 6, kind: input, shape index: {}]
  %s7 = inlined_call_operand.hbm [shape: f32[32,128], index: 7, kind: output, shape index: {}]
  %s8 = sld [smem:[#allocation0]]
  $region58: #{tpu_custom_call.1} parent=0
    _
  %s10 = ssub.s32 1, %s8
  %s11 = scalar_select 0, %s10, %s8
  $region1: #{tpu_custom_call.1} parent=0
    #allocation2 [shape = 'u8[16384]{0}', space=vmem, size = 0x4000, scoped, tag = 'input window, operand 0, single buffered']
    #allocation3 [shape = 's32[1]{0}', space=sflag, size = 0x4, scoped, tag = 'scoped memory for tpu_custom_call.1']
    #allocation4 [shape = 's32[1]{0}', space=sflag, size = 0x4, scoped, tag = 'scoped memory for tpu_custom_call.1']
    #allocation5 [shape = 'u8[196608]{0}', space=vmem, size = 0x30000, scoped, tag = 'input window, operand 1, single buffered']
    #allocation6 [shape = 's32[1]{0}', space=sflag, size = 0x4, scoped, tag = 'scoped memory for tpu_custom_call.1']
    #allocation7 [shape = 'u8[196608]{0}', space=vmem, size = 0x30000, scoped, tag = 'input window, operand 3, single buffered']
    #allocation8 [shape = 'u8[16384]{0}', space=vmem, size = 0x4000, scoped, tag = 'input window, operand 5, single buffered']
    #allocation9 [shape = 's32[1]{0}', space=sflag, size = 0x4, scoped, tag = 'scoped memory for tpu_custom_call.1']
    #allocation10 [shape = 'u8[16384]{0}', space=vmem, size = 0x4000, scoped, tag = 'input window, operand 6, single buffered']
    #allocation11 [shape = 'u8[16384]{0}', space=vmem, size = 0x4000, scoped, tag = 'output window, operand 0, single buffered']
    %12 = vsyncpa [#allocation3], 0
    %13 = vsyncpa [#allocation6], 0
    %14 = vsyncpa [#allocation9], 0
    %15 = vsyncpa [#allocation4], 0
    // Predicated region
    $region2: #{tpu_custom_call.1} parent=1 // pred_check
      _
    $region3: #{tpu_custom_call.1} parent=1 // pred_check_branch
      %17 = sbr.rel (0) target = $region5
    $region4: #{tpu_custom_call.1} parent=1 // pred_region
      %19 = vsyncadd [#allocation3], 0
      %s20 = sshll.u32 %s0, 4
      %s21 = int_to_ptr.hbm [resolvable:$true] %s20
      %s22 = sshll.u32 [#allocation2], 4
      %s23 = int_to_ptr.vmem [resolvable:$true] %s22
      %28 = dma.hbm_to_vmem [thread:$0]  %s21, 512, %s23, [#allocation3], 128, 128, 8
    $region5: #{tpu_custom_call.1} parent=1 // pred_fallthru
      _
    // Predicated region
    $region6: #{tpu_custom_call.1} parent=1 // pred_check
      _
    $region7: #{tpu_custom_call.1} parent=1 // pred_check_branch
      %30 = sbr.rel (0) target = $region9
    $region8: #{tpu_custom_call.1} parent=1 // pred_region
      %32 = vsyncadd [#allocation6], 0
      %s33 = sshll.u32 %s1, 4
      %s34 = int_to_ptr.hbm [resolvable:$true] %s33
      %s35 = sshll.u32 [#allocation5], 4
      %s36 = int_to_ptr.vmem [resolvable:$true] %s35
      %41 = dma.hbm_to_vmem [thread:$0]  %s34, 6144, %s36, [#allocation6], 128, 128, 8
    $region9: #{tpu_custom_call.1} parent=1 // pred_fallthru
      _
    // Predicated region
    $region10: #{tpu_custom_call.1} parent=1 // pred_check
      _
    $region11: #{tpu_custom_call.1} parent=1 // pred_check_branch
      %43 = sbr.rel (0) target = $region13
    $region12: #{tpu_custom_call.1} parent=1 // pred_region
      _
    $region13: #{tpu_custom_call.1} parent=1 // pred_fallthru
      _
    // Predicated region
    $region14: #{tpu_custom_call.1} parent=1 // pred_check
      _
    $region15: #{tpu_custom_call.1} parent=1 // pred_check_branch
      %45 = sbr.rel (0) target = $region17
    $region16: #{tpu_custom_call.1} parent=1 // pred_region
      %47 = vsyncadd [#allocation6], 0
      %s48 = sshll.u32 %s3, 4
      %s49 = int_to_ptr.hbm [resolvable:$true] %s48
      %s50 = sshll.u32 [#allocation7], 4
      %s51 = int_to_ptr.vmem [resolvable:$true] %s50
      %56 = dma.hbm_to_vmem [thread:$0]  %s49, 6144, %s51, [#allocation6], 128, 128, 8
    $region17: #{tpu_custom_call.1} parent=1 // pred_fallthru
      _
    // Predicated region
    $region18: #{tpu_custom_call.1} parent=1 // pred_check
      _
    $region19: #{tpu_custom_call.1} parent=1 // pred_check_branch
      %58 = sbr.rel (0) target = $region21
    $region20: #{tpu_custom_call.1} parent=1 // pred_region
      _
    $region21: #{tpu_custom_call.1} parent=1 // pred_fallthru
      _
    // Predicated region
    $region22: #{tpu_custom_call.1} parent=1 // pred_check
      _
    $region23: #{tpu_custom_call.1} parent=1 // pred_check_branch
      %60 = sbr.rel (0) target = $region25
    $region24: #{tpu_custom_call.1} parent=1 // pred_region
      %62 = vsyncadd [#allocation9], 0
      %s63 = sshll.u32 %s5, 4
      %s64 = int_to_ptr.hbm [resolvable:$true] %s63
      %s65 = sshll.u32 [#allocation8], 4
      %s66 = int_to_ptr.vmem [resolvable:$true] %s65
      %71 = dma.hbm_to_vmem [thread:$0]  %s64, 512, %s66, [#allocation9], 128, 128, 8
    $region25: #{tpu_custom_call.1} parent=1 // pred_fallthru
      _
    // Predicated region
    $region26: #{tpu_custom_call.1} parent=1 // pred_check
      _
    $region27: #{tpu_custom_call.1} parent=1 // pred_check_branch
      %73 = sbr.rel (0) target = $region29
    $region28: #{tpu_custom_call.1} parent=1 // pred_region
      %75 = vsyncadd [#allocation9], 0
      %s76 = sshll.u32 %s6, 4
      %s77 = int_to_ptr.hbm [resolvable:$true] %s76
      %s78 = sshll.u32 [#allocation10], 4
      %s79 = int_to_ptr.vmem [resolvable:$true] %s78
      %84 = dma.hbm_to_vmem [thread:$0]  %s77, 512, %s79, [#allocation9], 128, 128, 8
    $region29: #{tpu_custom_call.1} parent=1 // pred_fallthru
      _
    // Predicated region
    $region30: #{tpu_custom_call.1} parent=1 // pred_check
      _
    $region31: #{tpu_custom_call.1} parent=1 // pred_check_branch
      %86 = sbr.rel (0) target = $region33
    $region32: #{tpu_custom_call.1} parent=1 // pred_region
      %88 = dma.done [#allocation3], 512
    $region33: #{tpu_custom_call.1} parent=1 // pred_fallthru
      _
    // Predicated region
    $region34: #{tpu_custom_call.1} parent=1 // pred_check
      _
    $region35: #{tpu_custom_call.1} parent=1 // pred_check_branch
      %90 = sbr.rel (0) target = $region37
    $region36: #{tpu_custom_call.1} parent=1 // pred_region
      %92 = dma.done [#allocation6], 6144
    $region37: #{tpu_custom_call.1} parent=1 // pred_fallthru
      _
    // Predicated region
    $region38: #{tpu_custom_call.1} parent=1 // pred_check
      _
    $region39: #{tpu_custom_call.1} parent=1 // pred_check_branch
      %94 = sbr.rel (0) target = $region41
    $region40: #{tpu_custom_call.1} parent=1 // pred_region
      %96 = dma.done [#allocation6], 6144
    $region41: #{tpu_custom_call.1} parent=1 // pred_fallthru
      _
    // Predicated region
    $region42: #{tpu_custom_call.1} parent=1 // pred_check
      _
    $region43: #{tpu_custom_call.1} parent=1 // pred_check_branch
      %98 = sbr.rel (0) target = $region45
    $region44: #{tpu_custom_call.1} parent=1 // pred_region
      %100 = dma.done [#allocation9], 512
    $region45: #{tpu_custom_call.1} parent=1 // pred_fallthru
      _
    // Predicated region
    $region46: #{tpu_custom_call.1} parent=1 // pred_check
      _
    $region47: #{tpu_custom_call.1} parent=1 // pred_check_branch
      %102 = sbr.rel (0) target = $region49
    $region48: #{tpu_custom_call.1} parent=1 // pred_region
      %104 = dma.done [#allocation9], 512
    $region49: #{tpu_custom_call.1} parent=1 // pred_fallthru
      _
    %v105 = vld [vmem:[#allocation2] sm:$0xff]
    %v106 = vld [vmem:[#allocation2 + $0x8] sm:$0xff]
    %v107 = vld [vmem:[#allocation2 + $0x10] sm:$0xff]
    %v108 = vld [vmem:[#allocation2 + $0x18] sm:$0xff]
    %v109 = vrot.slane %v105, 7
    %v110 = vrot.slane %v106, 7
    %v111 = vrot.slane %v107, 7
    %v112 = vrot.slane %v108, 7
    %v113 = vlaneseq
    %v114 = vshrl.u32 %v113, 7
    %vm115 = vcmp.lt.s32.totalorder %v114, 1
    %v116 = vsel %vm115, %v111, %v112
    %v117 = vsel %vm115, %v110, %v111
    %v118 = vsel %vm115, %v109, %v110
    %v119 = vsel %vm115, %v112, %v109
    %v120 = vld [vmem:[#allocation8] sm:$0xff]
    %v121 = vld [vmem:[#allocation8 + $0x8] sm:$0xff]
    %v122 = vld [vmem:[#allocation8 + $0x10] sm:$0xff]
    %v123 = vld [vmem:[#allocation8 + $0x18] sm:$0xff]
    %v124 = vmul.f32 %v119, %v120
    %v125 = vmul.f32 %v118, %v121
    %v126 = vmul.f32 %v117, %v122
    %v127 = vmul.f32 %v116, %v123
    %v128 = vrot.slane %v105, 1
    %v129 = vrot.slane %v106, 1
    %v130 = vrot.slane %v107, 1
    %v131 = vrot.slane %v108, 1
    %vm132 = vcmp.lt.s32.totalorder %v114, 7
    %v133 = vsel %vm132, %v130, %v131
    %v134 = vsel %vm132, %v129, %v130
    %v135 = vsel %vm132, %v128, %v129
    %v136 = vsel %vm132, %v131, %v128
    %v137 = vld [vmem:[#allocation10] sm:$0xff]
    %v138 = vld [vmem:[#allocation10 + $0x8] sm:$0xff]
    %v139 = vld [vmem:[#allocation10 + $0x10] sm:$0xff]
    %v140 = vld [vmem:[#allocation10 + $0x18] sm:$0xff]
    %v141 = vmul.f32 %v135, %v137
    %v142 = vmul.f32 %v134, %v138
    %v143 = vmul.f32 %v133, %v139
    %v144 = vmul.f32 %v136, %v140
    %v145 = vld [vmem:[#allocation5] sm:$0xff]
    %v146 = vld [vmem:[#allocation5 + $0x8] sm:$0xff]
    %v147 = vld [vmem:[#allocation5 + $0x10] sm:$0xff]
    %v148 = vld [vmem:[#allocation5 + $0x18] sm:$0xff]
    %v149 = vld [vmem:[#allocation5 + $0x20] sm:$0xff]
    %v150 = vld [vmem:[#allocation5 + $0x28] sm:$0xff]
    %v151 = vld [vmem:[#allocation5 + $0x30] sm:$0xff]
    %v152 = vld [vmem:[#allocation5 + $0x38] sm:$0xff]
    %v153 = vld [vmem:[#allocation5 + $0x40] sm:$0xff]
    %v154 = vld [vmem:[#allocation5 + $0x48] sm:$0xff]
    %v155 = vld [vmem:[#allocation5 + $0x50] sm:$0xff]
    %v156 = vld [vmem:[#allocation5 + $0x58] sm:$0xff]
    %v157 = vld [vmem:[#allocation5 + $0x60] sm:$0xff]
    %v158 = vld [vmem:[#allocation5 + $0x68] sm:$0xff]
    %v159 = vld [vmem:[#allocation5 + $0x70] sm:$0xff]
    %v160 = vld [vmem:[#allocation5 + $0x78] sm:$0xff]
    %v161 = vld [vmem:[#allocation5 + $0x80] sm:$0xff]
    %v162 = vld [vmem:[#allocation5 + $0x88] sm:$0xff]
    %v163 = vld [vmem:[#allocation5 + $0x90] sm:$0xff]
    %v164 = vld [vmem:[#allocation5 + $0x98] sm:$0xff]
    %v165 = vld [vmem:[#allocation5 + $0xa0] sm:$0xff]
    %v166 = vld [vmem:[#allocation5 + $0xa8] sm:$0xff]
    %v167 = vld [vmem:[#allocation5 + $0xb0] sm:$0xff]
    %v168 = vld [vmem:[#allocation5 + $0xb8] sm:$0xff]
    %v169 = vld [vmem:[#allocation5 + $0xc0] sm:$0xff]
    %v170 = vld [vmem:[#allocation5 + $0xc8] sm:$0xff]
    %v171 = vld [vmem:[#allocation5 + $0xd0] sm:$0xff]
    %v172 = vld [vmem:[#allocation5 + $0xd8] sm:$0xff]
    %v173 = vld [vmem:[#allocation5 + $0xe0] sm:$0xff]
    %v174 = vld [vmem:[#allocation5 + $0xe8] sm:$0xff]
    %v175 = vld [vmem:[#allocation5 + $0xf0] sm:$0xff]
    %v176 = vld [vmem:[#allocation5 + $0xf8] sm:$0xff]
    %v177 = vld [vmem:[#allocation5 + $0x100] sm:$0xff]
    %v178 = vld [vmem:[#allocation5 + $0x108] sm:$0xff]
    %v179 = vld [vmem:[#allocation5 + $0x110] sm:$0xff]
    %v180 = vld [vmem:[#allocation5 + $0x118] sm:$0xff]
    %v181 = vld [vmem:[#allocation5 + $0x120] sm:$0xff]
    %v182 = vld [vmem:[#allocation5 + $0x128] sm:$0xff]
    %v183 = vld [vmem:[#allocation5 + $0x130] sm:$0xff]
    %v184 = vld [vmem:[#allocation5 + $0x138] sm:$0xff]
    %v185 = vld [vmem:[#allocation5 + $0x140] sm:$0xff]
    %v186 = vld [vmem:[#allocation5 + $0x148] sm:$0xff]
    %v187 = vld [vmem:[#allocation5 + $0x150] sm:$0xff]
    %v188 = vld [vmem:[#allocation5 + $0x158] sm:$0xff]
    %v189 = vld [vmem:[#allocation5 + $0x160] sm:$0xff]
    %v190 = vld [vmem:[#allocation5 + $0x168] sm:$0xff]
    %v191 = vld [vmem:[#allocation5 + $0x170] sm:$0xff]
    %v192 = vld [vmem:[#allocation5 + $0x178] sm:$0xff]
    %v193 = vld [vmem:[%s2] sm:$0x1]
    %v195 = vperm.slane %v193, 0
    %197 = vmatpush.msra.mxu0 %v160
    %198 = vmatpush.msra.mxu0 %v159
    %199 = vmatpush.msra.mxu0 %v158
    %200 = vmatpush.msra.mxu0 %v157
    %201 = vmatpush.msra.mxu0 %v156
    %202 = vmatpush.msra.mxu0 %v155
    %203 = vmatpush.msra.mxu0 %v154
    %204 = vmatpush.msra.mxu0 %v153
    %205 = vmatpush.msra.mxu0 %v152
    %206 = vmatpush.msra.mxu0 %v151
    %207 = vmatpush.msra.mxu0 %v150
    %208 = vmatpush.msra.mxu0 %v149
    %209 = vmatpush.msra.mxu0 %v148
    %210 = vmatpush.msra.mxu0 %v147
    %211 = vmatpush.msra.mxu0 %v146
    %212 = vmatpush.msra.mxu0 %v145
    %213 = vmatmul.f32.gmra.mxu0 %v124
    %v214 = vpop.f32.mrf.mxu0
    %v215 = vadd.f32 %v195, %v214
    %216 = vmatmul.f32.gmra.mxu0 %v125
    %v217 = vpop.f32.mrf.mxu0
    %v218 = vadd.f32 %v195, %v217
    %219 = vmatmul.f32.gmra.mxu0 %v126
    %v220 = vpop.f32.mrf.mxu0
    %v221 = vadd.f32 %v195, %v220
    %222 = vmatmul.f32.gmra.mxu0 %v127
    %v223 = vpop.f32.mrf.mxu0
    %v224 = vadd.f32 %v195, %v223
    %225 = vdwg.mxu0
    %226 = vmatpush.msra.mxu0 %v176
    %227 = vmatpush.msra.mxu0 %v175
    %228 = vmatpush.msra.mxu0 %v174
    %229 = vmatpush.msra.mxu0 %v173
    %230 = vmatpush.msra.mxu0 %v172
    %231 = vmatpush.msra.mxu0 %v171
    %232 = vmatpush.msra.mxu0 %v170
    %233 = vmatpush.msra.mxu0 %v169
    %234 = vmatpush.msra.mxu0 %v168
    %235 = vmatpush.msra.mxu0 %v167
    %236 = vmatpush.msra.mxu0 %v166
    %237 = vmatpush.msra.mxu0 %v165
    %238 = vmatpush.msra.mxu0 %v164
    %239 = vmatpush.msra.mxu0 %v163
    %240 = vmatpush.msra.mxu0 %v162
    %241 = vmatpush.msra.mxu0 %v161
    %242 = vmatmul.f32.gmra.mxu0 %v105
    %v243 = vpop.f32.mrf.mxu0
    %v244 = vadd.f32 %v215, %v243
    %245 = vmatmul.f32.gmra.mxu0 %v106
    %v246 = vpop.f32.mrf.mxu0
    %v247 = vadd.f32 %v218, %v246
    %248 = vmatmul.f32.gmra.mxu0 %v107
    %v249 = vpop.f32.mrf.mxu0
    %v250 = vadd.f32 %v221, %v249
    %251 = vmatmul.f32.gmra.mxu0 %v108
    %v252 = vpop.f32.mrf.mxu0
    %v253 = vadd.f32 %v224, %v252
    %254 = vdwg.mxu0
    %255 = vmatpush.msra.mxu0 %v192
    %256 = vmatpush.msra.mxu0 %v191
    %257 = vmatpush.msra.mxu0 %v190
    %258 = vmatpush.msra.mxu0 %v189
    %259 = vmatpush.msra.mxu0 %v188
    %260 = vmatpush.msra.mxu0 %v187
    %261 = vmatpush.msra.mxu0 %v186
    %262 = vmatpush.msra.mxu0 %v185
    %263 = vmatpush.msra.mxu0 %v184
    %264 = vmatpush.msra.mxu0 %v183
    %265 = vmatpush.msra.mxu0 %v182
    %266 = vmatpush.msra.mxu0 %v181
    %267 = vmatpush.msra.mxu0 %v180
    %268 = vmatpush.msra.mxu0 %v179
    %269 = vmatpush.msra.mxu0 %v178
    %270 = vmatpush.msra.mxu0 %v177
    %271 = vmatmul.f32.gmra.mxu0 %v141
    %v272 = vpop.f32.mrf.mxu0
    %v273 = vadd.f32 %v244, %v272
    %274 = vmatmul.f32.gmra.mxu0 %v142
    %v275 = vpop.f32.mrf.mxu0
    %v276 = vadd.f32 %v247, %v275
    %277 = vmatmul.f32.gmra.mxu0 %v143
    %v278 = vpop.f32.mrf.mxu0
    %v279 = vadd.f32 %v250, %v278
    %280 = vmatmul.f32.gmra.mxu0 %v144
    %v281 = vpop.f32.mrf.mxu0
    %v282 = vadd.f32 %v253, %v281
    %283 = vdwg.mxu0
    %v284 = vmax.f32 %v273, 0.0
    %v285 = vmax.f32 %v276, 0.0
    %v286 = vmax.f32 %v279, 0.0
    %v287 = vmax.f32 %v282, 0.0
    %v288 = vrot.slane %v284, 7
    %v289 = vrot.slane %v285, 7
    %v290 = vrot.slane %v286, 7
    %v291 = vrot.slane %v287, 7
    %v292 = vsel %vm115, %v290, %v291
    %v293 = vsel %vm115, %v289, %v290
    %v294 = vsel %vm115, %v288, %v289
    %v295 = vsel %vm115, %v291, %v288
    %v296 = vmul.f32 %v295, %v120
    %v297 = vmul.f32 %v294, %v121
    %v298 = vmul.f32 %v293, %v122
    %v299 = vmul.f32 %v292, %v123
    %v300 = vrot.slane %v284, 1
    %v301 = vrot.slane %v285, 1
    %v302 = vrot.slane %v286, 1
    %v303 = vrot.slane %v287, 1
    %v304 = vsel %vm132, %v302, %v303
    %v305 = vsel %vm132, %v301, %v302
    %v306 = vsel %vm132, %v300, %v301
    %v307 = vsel %vm132, %v303, %v300
    %v308 = vmul.f32 %v306, %v137
    %v309 = vmul.f32 %v305, %v138
    %v310 = vmul.f32 %v304, %v139
    %v311 = vmul.f32 %v307, %v140
    %v312 = vld [vmem:[#allocation7] sm:$0xff]
    %v313 = vld [vmem:[#allocation7 + $0x8] sm:$0xff]
    %v314 = vld [vmem:[#allocation7 + $0x10] sm:$0xff]
    %v315 = vld [vmem:[#allocation7 + $0x18] sm:$0xff]
    %v316 = vld [vmem:[#allocation7 + $0x20] sm:$0xff]
    %v317 = vld [vmem:[#allocation7 + $0x28] sm:$0xff]
    %v318 = vld [vmem:[#allocation7 + $0x30] sm:$0xff]
    %v319 = vld [vmem:[#allocation7 + $0x38] sm:$0xff]
    %v320 = vld [vmem:[#allocation7 + $0x40] sm:$0xff]
    %v321 = vld [vmem:[#allocation7 + $0x48] sm:$0xff]
    %v322 = vld [vmem:[#allocation7 + $0x50] sm:$0xff]
    %v323 = vld [vmem:[#allocation7 + $0x58] sm:$0xff]
    %v324 = vld [vmem:[#allocation7 + $0x60] sm:$0xff]
    %v325 = vld [vmem:[#allocation7 + $0x68] sm:$0xff]
    %v326 = vld [vmem:[#allocation7 + $0x70] sm:$0xff]
    %v327 = vld [vmem:[#allocation7 + $0x78] sm:$0xff]
    %v328 = vld [vmem:[#allocation7 + $0x80] sm:$0xff]
    %v329 = vld [vmem:[#allocation7 + $0x88] sm:$0xff]
    %v330 = vld [vmem:[#allocation7 + $0x90] sm:$0xff]
    %v331 = vld [vmem:[#allocation7 + $0x98] sm:$0xff]
    %v332 = vld [vmem:[#allocation7 + $0xa0] sm:$0xff]
    %v333 = vld [vmem:[#allocation7 + $0xa8] sm:$0xff]
    %v334 = vld [vmem:[#allocation7 + $0xb0] sm:$0xff]
    %v335 = vld [vmem:[#allocation7 + $0xb8] sm:$0xff]
    %v336 = vld [vmem:[#allocation7 + $0xc0] sm:$0xff]
    %v337 = vld [vmem:[#allocation7 + $0xc8] sm:$0xff]
    %v338 = vld [vmem:[#allocation7 + $0xd0] sm:$0xff]
    %v339 = vld [vmem:[#allocation7 + $0xd8] sm:$0xff]
    %v340 = vld [vmem:[#allocation7 + $0xe0] sm:$0xff]
    %v341 = vld [vmem:[#allocation7 + $0xe8] sm:$0xff]
    %v342 = vld [vmem:[#allocation7 + $0xf0] sm:$0xff]
    %v343 = vld [vmem:[#allocation7 + $0xf8] sm:$0xff]
    %v344 = vld [vmem:[#allocation7 + $0x100] sm:$0xff]
    %v345 = vld [vmem:[#allocation7 + $0x108] sm:$0xff]
    %v346 = vld [vmem:[#allocation7 + $0x110] sm:$0xff]
    %v347 = vld [vmem:[#allocation7 + $0x118] sm:$0xff]
    %v348 = vld [vmem:[#allocation7 + $0x120] sm:$0xff]
    %v349 = vld [vmem:[#allocation7 + $0x128] sm:$0xff]
    %v350 = vld [vmem:[#allocation7 + $0x130] sm:$0xff]
    %v351 = vld [vmem:[#allocation7 + $0x138] sm:$0xff]
    %v352 = vld [vmem:[#allocation7 + $0x140] sm:$0xff]
    %v353 = vld [vmem:[#allocation7 + $0x148] sm:$0xff]
    %v354 = vld [vmem:[#allocation7 + $0x150] sm:$0xff]
    %v355 = vld [vmem:[#allocation7 + $0x158] sm:$0xff]
    %v356 = vld [vmem:[#allocation7 + $0x160] sm:$0xff]
    %v357 = vld [vmem:[#allocation7 + $0x168] sm:$0xff]
    %v358 = vld [vmem:[#allocation7 + $0x170] sm:$0xff]
    %v359 = vld [vmem:[#allocation7 + $0x178] sm:$0xff]
    %v360 = vld [vmem:[%s4] sm:$0x1]
    %v362 = vperm.slane %v360, 0
    %364 = vmatpush.msra.mxu0 %v327
    %365 = vmatpush.msra.mxu0 %v326
    %366 = vmatpush.msra.mxu0 %v325
    %367 = vmatpush.msra.mxu0 %v324
    %368 = vmatpush.msra.mxu0 %v323
    %369 = vmatpush.msra.mxu0 %v322
    %370 = vmatpush.msra.mxu0 %v321
    %371 = vmatpush.msra.mxu0 %v320
    %372 = vmatpush.msra.mxu0 %v319
    %373 = vmatpush.msra.mxu0 %v318
    %374 = vmatpush.msra.mxu0 %v317
    %375 = vmatpush.msra.mxu0 %v316
    %376 = vmatpush.msra.mxu0 %v315
    %377 = vmatpush.msra.mxu0 %v314
    %378 = vmatpush.msra.mxu0 %v313
    %379 = vmatpush.msra.mxu0 %v312
    %380 = vmatmul.f32.gmra.mxu0 %v296
    %v381 = vpop.f32.mrf.mxu0
    %v382 = vadd.f32 %v362, %v381
    %383 = vmatmul.f32.gmra.mxu0 %v297
    %v384 = vpop.f32.mrf.mxu0
    %v385 = vadd.f32 %v362, %v384
    %386 = vmatmul.f32.gmra.mxu0 %v298
    %v387 = vpop.f32.mrf.mxu0
    %v388 = vadd.f32 %v362, %v387
    %389 = vmatmul.f32.gmra.mxu0 %v299
    %v390 = vpop.f32.mrf.mxu0
    %v391 = vadd.f32 %v362, %v390
    %392 = vdwg.mxu0
    %393 = vmatpush.msra.mxu0 %v343
    %394 = vmatpush.msra.mxu0 %v342
    %395 = vmatpush.msra.mxu0 %v341
    %396 = vmatpush.msra.mxu0 %v340
    %397 = vmatpush.msra.mxu0 %v339
    %398 = vmatpush.msra.mxu0 %v338
    %399 = vmatpush.msra.mxu0 %v337
    %400 = vmatpush.msra.mxu0 %v336
    %401 = vmatpush.msra.mxu0 %v335
    %402 = vmatpush.msra.mxu0 %v334
    %403 = vmatpush.msra.mxu0 %v333
    %404 = vmatpush.msra.mxu0 %v332
    %405 = vmatpush.msra.mxu0 %v331
    %406 = vmatpush.msra.mxu0 %v330
    %407 = vmatpush.msra.mxu0 %v329
    %408 = vmatpush.msra.mxu0 %v328
    %409 = vmatmul.f32.gmra.mxu0 %v284
    %v410 = vpop.f32.mrf.mxu0
    %v411 = vadd.f32 %v382, %v410
    %412 = vmatmul.f32.gmra.mxu0 %v285
    %v413 = vpop.f32.mrf.mxu0
    %v414 = vadd.f32 %v385, %v413
    %415 = vmatmul.f32.gmra.mxu0 %v286
    %v416 = vpop.f32.mrf.mxu0
    %v417 = vadd.f32 %v388, %v416
    %418 = vmatmul.f32.gmra.mxu0 %v287
    %v419 = vpop.f32.mrf.mxu0
    %v420 = vadd.f32 %v391, %v419
    %421 = vdwg.mxu0
    %422 = vmatpush.msra.mxu0 %v359
    %423 = vmatpush.msra.mxu0 %v358
    %424 = vmatpush.msra.mxu0 %v357
    %425 = vmatpush.msra.mxu0 %v356
    %426 = vmatpush.msra.mxu0 %v355
    %427 = vmatpush.msra.mxu0 %v354
    %428 = vmatpush.msra.mxu0 %v353
    %429 = vmatpush.msra.mxu0 %v352
    %430 = vmatpush.msra.mxu0 %v351
    %431 = vmatpush.msra.mxu0 %v350
    %432 = vmatpush.msra.mxu0 %v349
    %433 = vmatpush.msra.mxu0 %v348
    %434 = vmatpush.msra.mxu0 %v347
    %435 = vmatpush.msra.mxu0 %v346
    %436 = vmatpush.msra.mxu0 %v345
    %437 = vmatpush.msra.mxu0 %v344
    %438 = vmatmul.f32.gmra.mxu0 %v308
    %v439 = vpop.f32.mrf.mxu0
    %v440 = vadd.f32 %v411, %v439
    %441 = vmatmul.f32.gmra.mxu0 %v309
    %v442 = vpop.f32.mrf.mxu0
    %v443 = vadd.f32 %v414, %v442
    %444 = vmatmul.f32.gmra.mxu0 %v310
    %v445 = vpop.f32.mrf.mxu0
    %v446 = vadd.f32 %v417, %v445
    %447 = vmatmul.f32.gmra.mxu0 %v311
    %v448 = vpop.f32.mrf.mxu0
    %v449 = vadd.f32 %v420, %v448
    %450 = vdwg.mxu0
    %v451 = vadd.f32 %v440, %v105
    %v452 = vadd.f32 %v443, %v106
    %v453 = vadd.f32 %v446, %v107
    %v454 = vadd.f32 %v449, %v108
    %v455 = vmax.f32 %v451, 0.0
    %v456 = vmax.f32 %v452, 0.0
    %v457 = vmax.f32 %v453, 0.0
    %v458 = vmax.f32 %v454, 0.0
    %459 = vst [vmem:[#allocation11] sm:$0xff] %v455
    %460 = vst [vmem:[#allocation11 + $0x8] sm:$0xff] %v456
    %461 = vst [vmem:[#allocation11 + $0x10] sm:$0xff] %v457
    %462 = vst [vmem:[#allocation11 + $0x18] sm:$0xff] %v458
    // Predicated region
    $region50: #{tpu_custom_call.1} parent=1 // pred_check
      _
    $region51: #{tpu_custom_call.1} parent=1 // pred_check_branch
      %464 = sbr.rel (0) target = $region53
    $region52: #{tpu_custom_call.1} parent=1 // pred_region
      %466 = vsyncadd [#allocation4], 0
      %s467 = sshll.u32 [#allocation11], 4
      %s468 = int_to_ptr.vmem [resolvable:$true] %s467
      %s469 = sshll.u32 %s7, 4
      %s470 = int_to_ptr.hbm [resolvable:$true] %s469
      %475 = dma.vmem_to_hbm [thread:$0]  %s468, 512, %s470, [#allocation4], 128, 128, 8
    $region53: #{tpu_custom_call.1} parent=1 // pred_fallthru
      _
    // Predicated region
    $region54: #{tpu_custom_call.1} parent=1 // pred_check
      _
    $region55: #{tpu_custom_call.1} parent=1 // pred_check_branch
      %477 = sbr.rel (0) target = $region57
    $region56: #{tpu_custom_call.1} parent=1 // pred_region
      %479 = dma.done [#allocation4], 512
    $region57: #{tpu_custom_call.1} parent=1 // pred_fallthru
      _
    %480 = vsyncpa [#allocation3], 1
    %481 = vsyncpa [#allocation6], 1
    %482 = vsyncpa [#allocation9], 1
    %483 = vsyncpa [#allocation4], 1

</llo_original>
